<compile_context>
chip_gen: v5e
topology: v5e:2x2
jax: 0.10.0
libtpu: 0.0.40
codegen_flags: <defaults>
</compile_context>

<pallas_src>
import math

import jax
import jax.numpy as jnp
from jax.experimental import pallas as pl
from jax.experimental.pallas import tpu as pltpu

# ---------------- model sizes (small, consistent with the module) ----------------
B = 4          # batch_size
QN = 32        # ques_num
E = 16         # emb_dim
H = 16         # hidden_dim
WD = 16        # weigh_dim
TN = 8         # target_num (padded targets per student)
NQ = 4         # n_ques (window of last questions)
P_HID = 64     # policy_mlp_hidden_dim_list = [2*WD, P_HID, QN]
H2 = 2 * H     # hidden_dim * 2
W2 = 2 * WD    # weigh_dim * 2
G4 = 4 * H2    # LSTM gates width (= 128 lanes, one full vreg row)


# ---------------------------- fused per-step kernel ----------------------------

def rar_step_kernel(
        # SMEM inputs (indices)
        lnq_ref, qid_ref,
        # VMEM inputs (persistent state + pre-drawn noise)
        qr_ref, emb_tbl_ref, trep_ref, bstate_ref, obs_ref, h_ref, c_ref, gumbel_ref,
        # VMEM inputs (folded weights)
        wblend_ref, wp0_ref, bp0_ref, wp1_ref, bp1_ref,
        w_emb_ref, w_obs_ref, whh_ref, b_lstm_ref,
        # outputs
        prob_ref, action_ref, h_out_ref, c_out_ref,
        # scratch
        lr_scr, emb_scr):
    # ---------- in-kernel gathers: SMEM-indexed VMEM row reads ----------
    inv_nq = 1.0 / float(NQ)
    for b in range(B):
        acc = qr_ref[pl.ds(lnq_ref[b, 0], 1), :]
        for j in range(1, NQ):
            acc = acc + qr_ref[pl.ds(lnq_ref[b, j], 1), :]
        lr_scr[pl.ds(b, 1), :] = acc * inv_nq                           # mean over NQ rows
        emb_scr[pl.ds(b, 1), :] = emb_tbl_ref[pl.ds(qid_ref[b], 1), :]  # raw_ques_embedding[qid]

    qr = qr_ref[...]                                                    # (QN, 2H)
    qr_mean = jnp.mean(qr, axis=0, keepdims=True)                       # (1, 2H)
    last_rep = lr_scr[...] + qr_mean                                    # (B, 2H)

    state = bstate_ref[...]                                             # (B, 2H)
    trep = trep_ref[...]                                                # (B, TN, 2H)

    # ---------- take_action: attention + blend + policy MLP + softmax ----------
    scale = 1.0 / math.sqrt(float(H2))
    scores = jnp.sum(state[:, None, :] * trep, axis=-1) * scale         # (B, TN)
    scores = scores - jnp.max(scores, axis=-1, keepdims=True)
    e = jnp.exp(scores)
    attn = e * pl.reciprocal(jnp.sum(e, axis=-1, keepdims=True), approx=True)
    att_target = jnp.sum(attn[:, :, None] * trep, axis=1)               # (B, 2H)

    # single matmul for W1(last_rep)+W2(att_target)+W3(state)
    xb = jnp.concatenate([last_rep, att_target, state], axis=-1)        # (B, 3*2H)
    blend = jnp.dot(xb, wblend_ref[...], preferred_element_type=jnp.float32)   # (B, 2W)

    h1 = jnp.dot(blend, wp0_ref[...], preferred_element_type=jnp.float32) + bp0_ref[...]
    logits = jnp.dot(h1, wp1_ref[...], preferred_element_type=jnp.float32) + bp1_ref[...]

    m = jnp.max(logits, axis=-1, keepdims=True)
    ex = jnp.exp(logits - m)
    prob = ex * pl.reciprocal(jnp.sum(ex, axis=-1, keepdims=True), approx=True)
    prob_ref[...] = prob

    # ---------- Categorical(prob).sample() via Gumbel-max (noise pre-drawn outside) ----------
    y = (logits - m) + gumbel_ref[...]
    ymax = jnp.max(y, axis=-1, keepdims=True)
    lane_q = jax.lax.broadcasted_iota(jnp.int32, (B, QN), 1)
    action = jnp.min(jnp.where(y >= ymax, lane_q, QN), axis=-1, keepdims=True)   # (B, 1)
    action_ref[...] = action

    # ---------- step_refresh: folded ques_correct_to_hidden + LSTM cell ----------
    emb = emb_scr[...]                                                   # (B, E)
    obs = obs_ref[...]                                                   # (B, 1)
    h = h_ref[...]                                                       # (B, 2H)
    c = c_ref[...]                                                       # (B, 2H)

    gates = (jnp.dot(emb, w_emb_ref[...], preferred_element_type=jnp.float32)
             + jnp.dot(h, whh_ref[...], preferred_element_type=jnp.float32)
             + obs * w_obs_ref[...]                                      # rank-1 obs term
             + b_lstm_ref[...])                                          # (B, 4*2H)

    # single full-vreg tanh; sigmoid(x) = 0.5*tanh(x/2)+0.5 for i,f,o gates
    lane = jax.lax.broadcasted_iota(jnp.int32, (B, G4), 1)
    is_g = (lane >= 2 * H2) & (lane < 3 * H2)                            # PyTorch order i,f,g,o
    t = jnp.tanh(jnp.where(is_g, gates, 0.5 * gates))
    act = jnp.where(is_g, t, 0.5 * t + 0.5)

    i_g = act[:, 0 * H2:1 * H2]
    f_g = act[:, 1 * H2:2 * H2]
    g_g = act[:, 2 * H2:3 * H2]
    o_g = act[:, 3 * H2:4 * H2]

    c_new = f_g * c + i_g * g_g
    h_new = o_g * jnp.tanh(c_new)

    h_out_ref[...] = h_new
    c_out_ref[...] = c_new


# ---------------------------- pallas_call wrapper ----------------------------

_VMEM = pl.BlockSpec(memory_space=pltpu.MemorySpace.VMEM)
_SMEM = pl.BlockSpec(memory_space=pltpu.MemorySpace.SMEM)

_rar_step = pl.pallas_call(
    rar_step_kernel,
    out_shape=(jax.ShapeDtypeStruct((B, QN), jnp.float32),   # prob
               jax.ShapeDtypeStruct((B, 1), jnp.int32),      # action
               jax.ShapeDtypeStruct((B, H2), jnp.float32),   # h_new
               jax.ShapeDtypeStruct((B, H2), jnp.float32)),  # c_new
    in_specs=[_SMEM, _SMEM] + [_VMEM] * 17,
    out_specs=(_VMEM, _VMEM, _VMEM, _VMEM),
    scratch_shapes=(pltpu.VMEM((B, H2), jnp.float32),        # gathered last_n_ques mean
                    pltpu.VMEM((B, E), jnp.float32)),        # gathered question embeddings
)


# ---------------------------- parameter folding (done once) ----------------------------

def fold_params(p):
    """Algebraic folds that keep forward semantics but cut MXU matmuls 7 -> 5."""
    wfull = p["Wqc_T"] @ p["Wih_T"]                                   # (E+1, 4*2H)
    return {
        "Wblend_T": jnp.concatenate([p["W1_T"], p["W2_T"], p["W3_T"]], axis=0),  # (3*2H, 2W)
        "Wp0_T": p["Wp0_T"], "bp0": p["bp0"],
        "Wp1_T": p["Wp1_T"], "bp1": p["bp1"],
        "W_emb_lstm": wfull[:E],                                       # (E, 4*2H)
        "w_obs_lstm": wfull[E:E + 1],                                  # (1, 4*2H)
        "Whh_T": p["Whh_T"],                                           # (2H, 4*2H)
        "b_lstm": p["bqc"] @ p["Wih_T"] + p["bih"] + p["bhh"],         # (1, 4*2H)
    }


# ---------------------------- forward (single fused kernel call) ----------------------------

def rar_forward(fparams, state, ques_id, observation, key):
    bstate = state["batch_state"].reshape(B, H2)           # squeeze (view)
    h0 = state["hc"][0].reshape(B, H2)
    c0 = state["hc"][1].reshape(B, H2)
    obs = observation.reshape(B, 1).astype(jnp.float32)
    gumbel = jax.random.gumbel(key, (B, QN), jnp.float32)  # noise for Categorical sampling

    prob, action, h_new, c_new = _rar_step(
        state["last_n_ques"].astype(jnp.int32),
        ques_id.astype(jnp.int32),
        state["ques_representation"],
        state["raw_ques_embedding"],
        state["batch_T_rep"],
        bstate, obs, h0, c0, gumbel,
        fparams["Wblend_T"],
        fparams["Wp0_T"], fparams["bp0"], fparams["Wp1_T"], fparams["bp1"],
        fparams["W_emb_lstm"], fparams["w_obs_lstm"],
        fparams["Whh_T"], fparams["b_lstm"])

    kt_prob = None  # step_refresh has no return value -> forward's kt_prob is None
    new_hc = (h_new[None], c_new[None])
    return action.reshape(B), prob, kt_prob, new_hc


# ---------------------------- deterministic setup ----------------------------

def _init_params(key):
    ks = jax.random.split(key, 12)
    s = 0.1
    return {
        # attention blend (bias-free), stored transposed: (in=2H, out=2W)
        "W1_T": s * jax.random.normal(ks[0], (H2, W2), jnp.float32),
        "W2_T": s * jax.random.normal(ks[1], (H2, W2), jnp.float32),
        "W3_T": s * jax.random.normal(ks[2], (H2, W2), jnp.float32),
        # policy_network: [2W -> P_HID -> QN]
        "Wp0_T": s * jax.random.normal(ks[3], (W2, P_HID), jnp.float32),
        "bp0": s * jax.random.normal(ks[4], (1, P_HID), jnp.float32),
        "Wp1_T": s * jax.random.normal(ks[5], (P_HID, QN), jnp.float32),
        "bp1": s * jax.random.normal(ks[6], (1, QN), jnp.float32),
        # ques_correct_to_hidden: (E+1 -> H)
        "Wqc_T": s * jax.random.normal(ks[7], (E + 1, H), jnp.float32),
        "bqc": s * jax.random.normal(ks[8], (1, H), jnp.float32),
        # init_state_encoder LSTM(input=H, hidden=2H), PyTorch gate order i,f,g,o
        "Wih_T": s * jax.random.normal(ks[9], (H, 4 * H2), jnp.float32),
        "Whh_T": s * jax.random.normal(ks[10], (H2, 4 * H2), jnp.float32),
        "bih": s * jax.random.normal(ks[11], (1, 4 * H2), jnp.float32),
        "bhh": jnp.zeros((1, 4 * H2), jnp.float32),
    }


def _init_state(key):
    ks = jax.random.split(key, 6)
    return {
        "raw_ques_embedding": jax.random.normal(ks[0], (QN, E), jnp.float32),
        "ques_representation": jax.random.normal(ks[1], (QN, H2), jnp.float32),
        "batch_T_rep": jax.random.normal(ks[2], (B, TN, H2), jnp.float32),
        "batch_state": jax.random.normal(ks[3], (B, 1, H2), jnp.float32),
        "last_n_ques": jax.random.randint(ks[4], (B, NQ), 0, QN, jnp.int32),
        "hc": (0.1 * jax.random.normal(ks[5], (1, B, H2), jnp.float32),
               jnp.zeros((1, B, H2), jnp.float32)),
    }


if __name__ == "__main__":
    root = jax.random.PRNGKey(0)
    k_params, k_state, k_qid, k_obs, k_sample = jax.random.split(root, 5)

    params = _init_params(k_params)
    fparams = fold_params(params)
    state = _init_state(k_state)

    ques_id = jax.random.randint(k_qid, (B,), 0, QN, jnp.int32)
    observation = jax.random.bernoulli(k_obs, 0.5, (B,)).astype(jnp.float32)

    action, prob, kt_prob, new_hc = rar_forward(fparams, state, ques_id, observation, k_sample)
    jax.block_until_ready((action, prob, new_hc))

    assert action.shape == (B,)
    assert prob.shape == (B, QN)
    assert kt_prob is None
    assert new_hc[0].shape == (1, B, H2) and new_hc[1].shape == (1, B, H2)
    assert bool(jnp.all(jnp.isfinite(prob)))
    assert bool(jnp.all(jnp.isfinite(new_hc[0]))) and bool(jnp.all(jnp.isfinite(new_hc[1])))
    assert bool(jnp.all((action >= 0) & (action < QN)))
    assert bool(jnp.all(jnp.abs(jnp.sum(prob, axis=-1) - 1.0) < 5e-3))

    print("KERNEL_OK")
</pallas_src>

<mosaic_0001>
module attributes {stable_mosaic.version = 11 : i64} {
  func.func @rar_step_kernel(%arg0: memref<4x4xi32, #tpu.memory_space<smem>>, %arg1: memref<4xi32, #tpu.memory_space<smem>>, %arg2: memref<32x32xf32, #tpu.memory_space<vmem>>, %arg3: memref<32x16xf32, #tpu.memory_space<vmem>>, %arg4: memref<4x8x32xf32, #tpu.memory_space<vmem>>, %arg5: memref<4x32xf32, #tpu.memory_space<vmem>>, %arg6: memref<4x1xf32, #tpu.memory_space<vmem>>, %arg7: memref<4x32xf32, #tpu.memory_space<vmem>>, %arg8: memref<4x32xf32, #tpu.memory_space<vmem>>, %arg9: memref<4x32xf32, #tpu.memory_space<vmem>>, %arg10: memref<96x32xf32, #tpu.memory_space<vmem>>, %arg11: memref<32x64xf32, #tpu.memory_space<vmem>>, %arg12: memref<1x64xf32, #tpu.memory_space<vmem>>, %arg13: memref<64x32xf32, #tpu.memory_space<vmem>>, %arg14: memref<1x32xf32, #tpu.memory_space<vmem>>, %arg15: memref<16x128xf32, #tpu.memory_space<vmem>>, %arg16: memref<1x128xf32, #tpu.memory_space<vmem>>, %arg17: memref<32x128xf32, #tpu.memory_space<vmem>>, %arg18: memref<1x128xf32, #tpu.memory_space<vmem>>, %arg19: memref<4x32xf32, #tpu.memory_space<vmem>>, %arg20: memref<4x1xi32, #tpu.memory_space<vmem>>, %arg21: memref<4x32xf32, #tpu.memory_space<vmem>>, %arg22: memref<4x32xf32, #tpu.memory_space<vmem>>, %arg23: memref<4x32xf32, #tpu.memory_space<vmem>>, %arg24: memref<4x16xf32, #tpu.memory_space<vmem>>) attributes {dimension_semantics = [], scalar_prefetch = 0 : i64, scratch_operands = 2 : i64, tpu.core_type = #tpu.core_type<tc>} {
    %c0 = arith.constant 0 : index
    %c0_0 = arith.constant 0 : index
    %0 = memref.load %arg0[%c0, %c0_0] : memref<4x4xi32, #tpu.memory_space<smem>>
    %1 = arith.index_cast %0 : i32 to index
    %c0_1 = arith.constant 0 : index
    %2 = vector.load %arg2[%1, %c0_1] : memref<32x32xf32, #tpu.memory_space<vmem>>, vector<1x32xf32>
    %c0_2 = arith.constant 0 : index
    %c1 = arith.constant 1 : index
    %3 = memref.load %arg0[%c0_2, %c1] : memref<4x4xi32, #tpu.memory_space<smem>>
    %4 = arith.index_cast %3 : i32 to index
    %c0_3 = arith.constant 0 : index
    %5 = vector.load %arg2[%4, %c0_3] : memref<32x32xf32, #tpu.memory_space<vmem>>, vector<1x32xf32>
    %6 = arith.addf %2, %5 : vector<1x32xf32>
    %c0_4 = arith.constant 0 : index
    %c2 = arith.constant 2 : index
    %7 = memref.load %arg0[%c0_4, %c2] : memref<4x4xi32, #tpu.memory_space<smem>>
    %8 = arith.index_cast %7 : i32 to index
    %c0_5 = arith.constant 0 : index
    %9 = vector.load %arg2[%8, %c0_5] : memref<32x32xf32, #tpu.memory_space<vmem>>, vector<1x32xf32>
    %10 = arith.addf %6, %9 : vector<1x32xf32>
    %c0_6 = arith.constant 0 : index
    %c3 = arith.constant 3 : index
    %11 = memref.load %arg0[%c0_6, %c3] : memref<4x4xi32, #tpu.memory_space<smem>>
    %12 = arith.index_cast %11 : i32 to index
    %c0_7 = arith.constant 0 : index
    %13 = vector.load %arg2[%12, %c0_7] : memref<32x32xf32, #tpu.memory_space<vmem>>, vector<1x32xf32>
    %14 = arith.addf %10, %13 : vector<1x32xf32>
    %cst = arith.constant 2.500000e-01 : f32
    %15 = vector.broadcast %cst : f32 to vector<1x32xf32>
    %16 = arith.mulf %14, %15 : vector<1x32xf32>
    %c0_8 = arith.constant 0 : index
    %c0_9 = arith.constant 0 : index
    %17 = vector.load %arg23[%c0_8, %c0_9] : memref<4x32xf32, #tpu.memory_space<vmem>>, vector<1x32xf32>
    tpu.vector_store %arg23[%c0_8, %c0_9], %16 {strides = array<i32>} : memref<4x32xf32, #tpu.memory_space<vmem>>, vector<1x32xf32>,
    %c0_10 = arith.constant 0 : index
    %18 = memref.load %arg1[%c0_10] : memref<4xi32, #tpu.memory_space<smem>>
    %19 = arith.index_cast %18 : i32 to index
    %c0_11 = arith.constant 0 : index
    %20 = vector.load %arg3[%19, %c0_11] : memref<32x16xf32, #tpu.memory_space<vmem>>, vector<1x16xf32>
    %c0_12 = arith.constant 0 : index
    %c0_13 = arith.constant 0 : index
    %21 = vector.load %arg24[%c0_12, %c0_13] : memref<4x16xf32, #tpu.memory_space<vmem>>, vector<1x16xf32>
    tpu.vector_store %arg24[%c0_12, %c0_13], %20 {strides = array<i32>} : memref<4x16xf32, #tpu.memory_space<vmem>>, vector<1x16xf32>,
    %c1_14 = arith.constant 1 : index
    %c0_15 = arith.constant 0 : index
    %22 = memref.load %arg0[%c1_14, %c0_15] : memref<4x4xi32, #tpu.memory_space<smem>>
    %23 = arith.index_cast %22 : i32 to index
    %c0_16 = arith.constant 0 : index
    %24 = vector.load %arg2[%23, %c0_16] : memref<32x32xf32, #tpu.memory_space<vmem>>, vector<1x32xf32>
    %c1_17 = arith.constant 1 : index
    %c1_18 = arith.constant 1 : index
    %25 = memref.load %arg0[%c1_17, %c1_18] : memref<4x4xi32, #tpu.memory_space<smem>>
    %26 = arith.index_cast %25 : i32 to index
    %c0_19 = arith.constant 0 : index
    %27 = vector.load %arg2[%26, %c0_19] : memref<32x32xf32, #tpu.memory_space<vmem>>, vector<1x32xf32>
    %28 = arith.addf %24, %27 : vector<1x32xf32>
    %c1_20 = arith.constant 1 : index
    %c2_21 = arith.constant 2 : index
    %29 = memref.load %arg0[%c1_20, %c2_21] : memref<4x4xi32, #tpu.memory_space<smem>>
    %30 = arith.index_cast %29 : i32 to index
    %c0_22 = arith.constant 0 : index
    %31 = vector.load %arg2[%30, %c0_22] : memref<32x32xf32, #tpu.memory_space<vmem>>, vector<1x32xf32>
    %32 = arith.addf %28, %31 : vector<1x32xf32>
    %c1_23 = arith.constant 1 : index
    %c3_24 = arith.constant 3 : index
    %33 = memref.load %arg0[%c1_23, %c3_24] : memref<4x4xi32, #tpu.memory_space<smem>>
    %34 = arith.index_cast %33 : i32 to index
    %c0_25 = arith.constant 0 : index
    %35 = vector.load %arg2[%34, %c0_25] : memref<32x32xf32, #tpu.memory_space<vmem>>, vector<1x32xf32>
    %36 = arith.addf %32, %35 : vector<1x32xf32>
    %cst_26 = arith.constant 2.500000e-01 : f32
    %37 = vector.broadcast %cst_26 : f32 to vector<1x32xf32>
    %38 = arith.mulf %36, %37 : vector<1x32xf32>
    %c1_27 = arith.constant 1 : index
    %c0_28 = arith.constant 0 : index
    %39 = vector.load %arg23[%c1_27, %c0_28] : memref<4x32xf32, #tpu.memory_space<vmem>>, vector<1x32xf32>
    tpu.vector_store %arg23[%c1_27, %c0_28], %38 {strides = array<i32>} : memref<4x32xf32, #tpu.memory_space<vmem>>, vector<1x32xf32>,
    %c1_29 = arith.constant 1 : index
    %40 = memref.load %arg1[%c1_29] : memref<4xi32, #tpu.memory_space<smem>>
    %41 = arith.index_cast %40 : i32 to index
    %c0_30 = arith.constant 0 : index
    %42 = vector.load %arg3[%41, %c0_30] : memref<32x16xf32, #tpu.memory_space<vmem>>, vector<1x16xf32>
    %c1_31 = arith.constant 1 : index
    %c0_32 = arith.constant 0 : index
    %43 = vector.load %arg24[%c1_31, %c0_32] : memref<4x16xf32, #tpu.memory_space<vmem>>, vector<1x16xf32>
    tpu.vector_store %arg24[%c1_31, %c0_32], %42 {strides = array<i32>} : memref<4x16xf32, #tpu.memory_space<vmem>>, vector<1x16xf32>,
    %c2_33 = arith.constant 2 : index
    %c0_34 = arith.constant 0 : index
    %44 = memref.load %arg0[%c2_33, %c0_34] : memref<4x4xi32, #tpu.memory_space<smem>>
    %45 = arith.index_cast %44 : i32 to index
    %c0_35 = arith.constant 0 : index
    %46 = vector.load %arg2[%45, %c0_35] : memref<32x32xf32, #tpu.memory_space<vmem>>, vector<1x32xf32>
    %c2_36 = arith.constant 2 : index
    %c1_37 = arith.constant 1 : index
    %47 = memref.load %arg0[%c2_36, %c1_37] : memref<4x4xi32, #tpu.memory_space<smem>>
    %48 = arith.index_cast %47 : i32 to index
    %c0_38 = arith.constant 0 : index
    %49 = vector.load %arg2[%48, %c0_38] : memref<32x32xf32, #tpu.memory_space<vmem>>, vector<1x32xf32>
    %50 = arith.addf %46, %49 : vector<1x32xf32>
    %c2_39 = arith.constant 2 : index
    %c2_40 = arith.constant 2 : index
    %51 = memref.load %arg0[%c2_39, %c2_40] : memref<4x4xi32, #tpu.memory_space<smem>>
    %52 = arith.index_cast %51 : i32 to index
    %c0_41 = arith.constant 0 : index
    %53 = vector.load %arg2[%52, %c0_41] : memref<32x32xf32, #tpu.memory_space<vmem>>, vector<1x32xf32>
    %54 = arith.addf %50, %53 : vector<1x32xf32>
    %c2_42 = arith.constant 2 : index
    %c3_43 = arith.constant 3 : index
    %55 = memref.load %arg0[%c2_42, %c3_43] : memref<4x4xi32, #tpu.memory_space<smem>>
    %56 = arith.index_cast %55 : i32 to index
    %c0_44 = arith.constant 0 : index
    %57 = vector.load %arg2[%56, %c0_44] : memref<32x32xf32, #tpu.memory_space<vmem>>, vector<1x32xf32>
    %58 = arith.addf %54, %57 : vector<1x32xf32>
    %cst_45 = arith.constant 2.500000e-01 : f32
    %59 = vector.broadcast %cst_45 : f32 to vector<1x32xf32>
    %60 = arith.mulf %58, %59 : vector<1x32xf32>
    %c2_46 = arith.constant 2 : index
    %c0_47 = arith.constant 0 : index
    %61 = vector.load %arg23[%c2_46, %c0_47] : memref<4x32xf32, #tpu.memory_space<vmem>>, vector<1x32xf32>
    tpu.vector_store %arg23[%c2_46, %c0_47], %60 {strides = array<i32>} : memref<4x32xf32, #tpu.memory_space<vmem>>, vector<1x32xf32>,
    %c2_48 = arith.constant 2 : index
    %62 = memref.load %arg1[%c2_48] : memref<4xi32, #tpu.memory_space<smem>>
    %63 = arith.index_cast %62 : i32 to index
    %c0_49 = arith.constant 0 : index
    %64 = vector.load %arg3[%63, %c0_49] : memref<32x16xf32, #tpu.memory_space<vmem>>, vector<1x16xf32>
    %c2_50 = arith.constant 2 : index
    %c0_51 = arith.constant 0 : index
    %65 = vector.load %arg24[%c2_50, %c0_51] : memref<4x16xf32, #tpu.memory_space<vmem>>, vector<1x16xf32>
    tpu.vector_store %arg24[%c2_50, %c0_51], %64 {strides = array<i32>} : memref<4x16xf32, #tpu.memory_space<vmem>>, vector<1x16xf32>,
    %c3_52 = arith.constant 3 : index
    %c0_53 = arith.constant 0 : index
    %66 = memref.load %arg0[%c3_52, %c0_53] : memref<4x4xi32, #tpu.memory_space<smem>>
    %67 = arith.index_cast %66 : i32 to index
    %c0_54 = arith.constant 0 : index
    %68 = vector.load %arg2[%67, %c0_54] : memref<32x32xf32, #tpu.memory_space<vmem>>, vector<1x32xf32>
    %c3_55 = arith.constant 3 : index
    %c1_56 = arith.constant 1 : index
    %69 = memref.load %arg0[%c3_55, %c1_56] : memref<4x4xi32, #tpu.memory_space<smem>>
    %70 = arith.index_cast %69 : i32 to index
    %c0_57 = arith.constant 0 : index
    %71 = vector.load %arg2[%70, %c0_57] : memref<32x32xf32, #tpu.memory_space<vmem>>, vector<1x32xf32>
    %72 = arith.addf %68, %71 : vector<1x32xf32>
    %c3_58 = arith.constant 3 : index
    %c2_59 = arith.constant 2 : index
    %73 = memref.load %arg0[%c3_58, %c2_59] : memref<4x4xi32, #tpu.memory_space<smem>>
    %74 = arith.index_cast %73 : i32 to index
    %c0_60 = arith.constant 0 : index
    %75 = vector.load %arg2[%74, %c0_60] : memref<32x32xf32, #tpu.memory_space<vmem>>, vector<1x32xf32>
    %76 = arith.addf %72, %75 : vector<1x32xf32>
    %c3_61 = arith.constant 3 : index
    %c3_62 = arith.constant 3 : index
    %77 = memref.load %arg0[%c3_61, %c3_62] : memref<4x4xi32, #tpu.memory_space<smem>>
    %78 = arith.index_cast %77 : i32 to index
    %c0_63 = arith.constant 0 : index
    %79 = vector.load %arg2[%78, %c0_63] : memref<32x32xf32, #tpu.memory_space<vmem>>, vector<1x32xf32>
    %80 = arith.addf %76, %79 : vector<1x32xf32>
    %cst_64 = arith.constant 2.500000e-01 : f32
    %81 = vector.broadcast %cst_64 : f32 to vector<1x32xf32>
    %82 = arith.mulf %80, %81 : vector<1x32xf32>
    %c3_65 = arith.constant 3 : index
    %c0_66 = arith.constant 0 : index
    %83 = vector.load %arg23[%c3_65, %c0_66] : memref<4x32xf32, #tpu.memory_space<vmem>>, vector<1x32xf32>
    tpu.vector_store %arg23[%c3_65, %c0_66], %82 {strides = array<i32>} : memref<4x32xf32, #tpu.memory_space<vmem>>, vector<1x32xf32>,
    %c3_67 = arith.constant 3 : index
    %84 = memref.load %arg1[%c3_67] : memref<4xi32, #tpu.memory_space<smem>>
    %85 = arith.index_cast %84 : i32 to index
    %c0_68 = arith.constant 0 : index
    %86 = vector.load %arg3[%85, %c0_68] : memref<32x16xf32, #tpu.memory_space<vmem>>, vector<1x16xf32>
    %c3_69 = arith.constant 3 : index
    %c0_70 = arith.constant 0 : index
    %87 = vector.load %arg24[%c3_69, %c0_70] : memref<4x16xf32, #tpu.memory_space<vmem>>, vector<1x16xf32>
    tpu.vector_store %arg24[%c3_69, %c0_70], %86 {strides = array<i32>} : memref<4x16xf32, #tpu.memory_space<vmem>>, vector<1x16xf32>,
    %c0_71 = arith.constant 0 : index
    %c0_72 = arith.constant 0 : index
    %88 = vector.load %arg2[%c0_71, %c0_72] : memref<32x32xf32, #tpu.memory_space<vmem>>, vector<32x32xf32>
    %cst_73 = arith.constant dense<0.000000e+00> : vector<32xf32>
    %89 = vector.multi_reduction <add>, %88, %cst_73 [0] : vector<32x32xf32> to vector<32xf32>
    %90 = vector.shape_cast %89 : vector<32xf32> to vector<1x32xf32>
    %cst_74 = arith.constant 3.200000e+01 : f32
    %91 = vector.broadcast %cst_74 : f32 to vector<1x32xf32>
    %92 = arith.divf %90, %91 : vector<1x32xf32>
    %c0_75 = arith.constant 0 : index
    %c0_76 = arith.constant 0 : index
    %93 = vector.load %arg23[%c0_75, %c0_76] : memref<4x32xf32, #tpu.memory_space<vmem>>, vector<4x32xf32>
    %94 = vector.broadcast %92 : vector<1x32xf32> to vector<4x32xf32>
    %95 = arith.addf %93, %94 : vector<4x32xf32>
    %c0_77 = arith.constant 0 : index
    %c0_78 = arith.constant 0 : index
    %96 = vector.load %arg5[%c0_77, %c0_78] : memref<4x32xf32, #tpu.memory_space<vmem>>, vector<4x32xf32>
    %c0_79 = arith.constant 0 : index
    %c0_80 = arith.constant 0 : index
    %c0_81 = arith.constant 0 : index
    %97 = vector.load %arg4[%c0_79, %c0_80, %c0_81] : memref<4x8x32xf32, #tpu.memory_space<vmem>>, vector<4x8x32xf32>
    %98 = vector.shape_cast %96 : vector<4x32xf32> to vector<4x1x32xf32>
    %99 = vector.broadcast %98 : vector<4x1x32xf32> to vector<4x8x32xf32>
    %100 = arith.mulf %99, %97 : vector<4x8x32xf32>
    %cst_82 = arith.constant dense<0.000000e+00> : vector<4x8xf32>
    %101 = vector.multi_reduction <add>, %100, %cst_82 [2] : vector<4x8x32xf32> to vector<4x8xf32>
    %cst_83 = arith.constant 0.176776692 : f32
    %102 = vector.broadcast %cst_83 : f32 to vector<4x8xf32>
    %103 = arith.mulf %101, %102 : vector<4x8xf32>
    %cst_84 = arith.constant dense<0xFF800000> : vector<4xf32>
    %104 = vector.multi_reduction <maximumf>, %103, %cst_84 [1] : vector<4x8xf32> to vector<4xf32>
    %105 = vector.shape_cast %104 : vector<4xf32> to vector<4x1xf32>
    %106 = vector.broadcast %105 : vector<4x1xf32> to vector<4x8xf32>
    %107 = arith.subf %103, %106 : vector<4x8xf32>
    %108 = math.exp %107 : vector<4x8xf32>
    %cst_85 = arith.constant dense<0.000000e+00> : vector<4xf32>
    %109 = vector.multi_reduction <add>, %108, %cst_85 [1] : vector<4x8xf32> to vector<4xf32>
    %110 = vector.shape_cast %109 : vector<4xf32> to vector<4x1xf32>
    %111 = tpu.reciprocal %110 {approx = true} : vector<4x1xf32> -> vector<4x1xf32>
    %112 = vector.broadcast %111 : vector<4x1xf32> to vector<4x8xf32>
    %113 = arith.mulf %108, %112 : vector<4x8xf32>
    %114 = vector.shape_cast %113 : vector<4x8xf32> to vector<4x8x1xf32>
    %115 = vector.broadcast %114 : vector<4x8x1xf32> to vector<4x8x32xf32>
    %116 = arith.mulf %115, %97 : vector<4x8x32xf32>
    %cst_86 = arith.constant dense<0.000000e+00> : vector<4x32xf32>
    %117 = vector.multi_reduction <add>, %116, %cst_86 [1] : vector<4x8x32xf32> to vector<4x32xf32>
    %118 = tpu.concatenate %95, %117, %96 in 1 : vector<4x32xf32>, vector<4x32xf32>, vector<4x32xf32> -> vector<4x96xf32>
    %c0_87 = arith.constant 0 : index
    %c0_88 = arith.constant 0 : index
    %119 = vector.load %arg10[%c0_87, %c0_88] : memref<96x32xf32, #tpu.memory_space<vmem>>, vector<96x32xf32>
    %cst_89 = arith.constant dense<0.000000e+00> : vector<4x32xf32>
    %120 = tpu.matmul %118, %119, %cst_89 {dimension_numbers = #tpu.dot_dimension_numbers<[1], [0], [0], [1], [0, 0, 1, 1], [], []>} : vector<4x96xf32>, vector<96x32xf32>, vector<4x32xf32> -> vector<4x32xf32>
    %c0_90 = arith.constant 0 : index
    %c0_91 = arith.constant 0 : index
    %121 = vector.load %arg11[%c0_90, %c0_91] : memref<32x64xf32, #tpu.memory_space<vmem>>, vector<32x64xf32>
    %cst_92 = arith.constant dense<0.000000e+00> : vector<4x64xf32>
    %122 = tpu.matmul %120, %121, %cst_92 {dimension_numbers = #tpu.dot_dimension_numbers<[1], [0], [0], [1], [0, 0, 1, 1], [], []>} : vector<4x32xf32>, vector<32x64xf32>, vector<4x64xf32> -> vector<4x64xf32>
    %c0_93 = arith.constant 0 : index
    %c0_94 = arith.constant 0 : index
    %123 = vector.load %arg12[%c0_93, %c0_94] : memref<1x64xf32, #tpu.memory_space<vmem>>, vector<1x64xf32>
    %124 = vector.broadcast %123 : vector<1x64xf32> to vector<4x64xf32>
    %125 = arith.addf %122, %124 : vector<4x64xf32>
    %c0_95 = arith.constant 0 : index
    %c0_96 = arith.constant 0 : index
    %126 = vector.load %arg13[%c0_95, %c0_96] : memref<64x32xf32, #tpu.memory_space<vmem>>, vector<64x32xf32>
    %cst_97 = arith.constant dense<0.000000e+00> : vector<4x32xf32>
    %127 = tpu.matmul %125, %126, %cst_97 {dimension_numbers = #tpu.dot_dimension_numbers<[1], [0], [0], [1], [0, 0, 1, 1], [], []>} : vector<4x64xf32>, vector<64x32xf32>, vector<4x32xf32> -> vector<4x32xf32>
    %c0_98 = arith.constant 0 : index
    %c0_99 = arith.constant 0 : index
    %128 = vector.load %arg14[%c0_98, %c0_99] : memref<1x32xf32, #tpu.memory_space<vmem>>, vector<1x32xf32>
    %129 = vector.broadcast %128 : vector<1x32xf32> to vector<4x32xf32>
    %130 = arith.addf %127, %129 : vector<4x32xf32>
    %cst_100 = arith.constant dense<0xFF800000> : vector<4xf32>
    %131 = vector.multi_reduction <maximumf>, %130, %cst_100 [1] : vector<4x32xf32> to vector<4xf32>
    %132 = vector.shape_cast %131 : vector<4xf32> to vector<4x1xf32>
    %133 = vector.broadcast %132 : vector<4x1xf32> to vector<4x32xf32>
    %134 = arith.subf %130, %133 : vector<4x32xf32>
    %135 = math.exp %134 : vector<4x32xf32>
    %cst_101 = arith.constant dense<0.000000e+00> : vector<4xf32>
    %136 = vector.multi_reduction <add>, %135, %cst_101 [1] : vector<4x32xf32> to vector<4xf32>
    %137 = vector.shape_cast %136 : vector<4xf32> to vector<4x1xf32>
    %138 = tpu.reciprocal %137 {approx = true} : vector<4x1xf32> -> vector<4x1xf32>
    %139 = vector.broadcast %138 : vector<4x1xf32> to vector<4x32xf32>
    %140 = arith.mulf %135, %139 : vector<4x32xf32>
    %c0_102 = arith.constant 0 : index
    %c0_103 = arith.constant 0 : index
    %141 = vector.load %arg19[%c0_102, %c0_103] : memref<4x32xf32, #tpu.memory_space<vmem>>, vector<4x32xf32>
    tpu.vector_store %arg19[%c0_102, %c0_103], %140 {strides = array<i32>} : memref<4x32xf32, #tpu.memory_space<vmem>>, vector<4x32xf32>,
    %142 = vector.broadcast %132 : vector<4x1xf32> to vector<4x32xf32>
    %143 = arith.subf %130, %142 : vector<4x32xf32>
    %c0_104 = arith.constant 0 : index
    %c0_105 = arith.constant 0 : index
    %144 = vector.load %arg9[%c0_104, %c0_105] : memref<4x32xf32, #tpu.memory_space<vmem>>, vector<4x32xf32>
    %145 = arith.addf %143, %144 : vector<4x32xf32>
    %cst_106 = arith.constant dense<0xFF800000> : vector<4xf32>
    %146 = vector.multi_reduction <maximumf>, %145, %cst_106 [1] : vector<4x32xf32> to vector<4xf32>
    %147 = vector.shape_cast %146 : vector<4xf32> to vector<4x1xf32>
    %148 = tpu.iota {dimensions = array<i32: 1>} : vector<4x32xi32>
    %149 = vector.broadcast %147 : vector<4x1xf32> to vector<4x32xf32>
    %150 = arith.cmpf oge, %145, %149 : vector<4x32xf32>
    %c32_i32 = arith.constant 32 : i32
    %151 = vector.broadcast %c32_i32 : i32 to vector<4x32xi32>
    %152 = arith.select %150, %148, %151 : vector<4x32xi1>, vector<4x32xi32>
    %cst_107 = arith.constant dense<2147483647> : vector<4xi32>
    %153 = vector.multi_reduction <minsi>, %152, %cst_107 [1] : vector<4x32xi32> to vector<4xi32>
    %154 = vector.shape_cast %153 : vector<4xi32> to vector<4x1xi32>
    %c0_108 = arith.constant 0 : index
    %c0_109 = arith.constant 0 : index
    %155 = vector.load %arg20[%c0_108, %c0_109] : memref<4x1xi32, #tpu.memory_space<vmem>>, vector<4x1xi32>
    tpu.vector_store %arg20[%c0_108, %c0_109], %154 {strides = array<i32>} : memref<4x1xi32, #tpu.memory_space<vmem>>, vector<4x1xi32>,
    %c0_110 = arith.constant 0 : index
    %c0_111 = arith.constant 0 : index
    %156 = vector.load %arg24[%c0_110, %c0_111] : memref<4x16xf32, #tpu.memory_space<vmem>>, vector<4x16xf32>
    %c0_112 = arith.constant 0 : index
    %c0_113 = arith.constant 0 : index
    %157 = vector.load %arg6[%c0_112, %c0_113] : memref<4x1xf32, #tpu.memory_space<vmem>>, vector<4x1xf32>
    %c0_114 = arith.constant 0 : index
    %c0_115 = arith.constant 0 : index
    %158 = vector.load %arg7[%c0_114, %c0_115] : memref<4x32xf32, #tpu.memory_space<vmem>>, vector<4x32xf32>
    %c0_116 = arith.constant 0 : index
    %c0_117 = arith.constant 0 : index
    %159 = vector.load %arg8[%c0_116, %c0_117] : memref<4x32xf32, #tpu.memory_space<vmem>>, vector<4x32xf32>
    %c0_118 = arith.constant 0 : index
    %c0_119 = arith.constant 0 : index
    %160 = vector.load %arg15[%c0_118, %c0_119] : memref<16x128xf32, #tpu.memory_space<vmem>>, vector<16x128xf32>
    %cst_120 = arith.constant dense<0.000000e+00> : vector<4x128xf32>
    %161 = tpu.matmul %156, %160, %cst_120 {dimension_numbers = #tpu.dot_dimension_numbers<[1], [0], [0], [1], [0, 0, 1, 1], [], []>} : vector<4x16xf32>, vector<16x128xf32>, vector<4x128xf32> -> vector<4x128xf32>
    %c0_121 = arith.constant 0 : index
    %c0_122 = arith.constant 0 : index
    %162 = vector.load %arg17[%c0_121, %c0_122] : memref<32x128xf32, #tpu.memory_space<vmem>>, vector<32x128xf32>
    %cst_123 = arith.constant dense<0.000000e+00> : vector<4x128xf32>
    %163 = tpu.matmul %158, %162, %cst_123 {dimension_numbers = #tpu.dot_dimension_numbers<[1], [0], [0], [1], [0, 0, 1, 1], [], []>} : vector<4x32xf32>, vector<32x128xf32>, vector<4x128xf32> -> vector<4x128xf32>
    %164 = arith.addf %161, %163 : vector<4x128xf32>
    %c0_124 = arith.constant 0 : index
    %c0_125 = arith.constant 0 : index
    %165 = vector.load %arg16[%c0_124, %c0_125] : memref<1x128xf32, #tpu.memory_space<vmem>>, vector<1x128xf32>
    %166 = vector.broadcast %157 : vector<4x1xf32> to vector<4x128xf32>
    %167 = vector.broadcast %165 : vector<1x128xf32> to vector<4x128xf32>
    %168 = arith.mulf %166, %167 : vector<4x128xf32>
    %169 = arith.addf %164, %168 : vector<4x128xf32>
    %c0_126 = arith.constant 0 : index
    %c0_127 = arith.constant 0 : index
    %170 = vector.load %arg18[%c0_126, %c0_127] : memref<1x128xf32, #tpu.memory_space<vmem>>, vector<1x128xf32>
    %171 = vector.broadcast %170 : vector<1x128xf32> to vector<4x128xf32>
    %172 = arith.addf %169, %171 : vector<4x128xf32>
    %173 = tpu.iota {dimensions = array<i32: 1>} : vector<4x128xi32>
    %c64_i32 = arith.constant 64 : i32
    %174 = vector.broadcast %c64_i32 : i32 to vector<4x128xi32>
    %175 = arith.cmpi sge, %173, %174 : vector<4x128xi32>
    %c96_i32 = arith.constant 96 : i32
    %176 = vector.broadcast %c96_i32 : i32 to vector<4x128xi32>
    %177 = arith.cmpi slt, %173, %176 : vector<4x128xi32>
    %178 = arith.andi %175, %177 : vector<4x128xi1>
    %cst_128 = arith.constant 5.000000e-01 : f32
    %179 = vector.broadcast %cst_128 : f32 to vector<4x128xf32>
    %180 = arith.mulf %179, %172 : vector<4x128xf32>
    %181 = arith.select %178, %172, %180 : vector<4x128xi1>, vector<4x128xf32>
    %182 = math.tanh %181 : vector<4x128xf32>
    %cst_129 = arith.constant 5.000000e-01 : f32
    %183 = vector.broadcast %cst_129 : f32 to vector<4x128xf32>
    %184 = arith.mulf %183, %182 : vector<4x128xf32>
    %cst_130 = arith.constant 5.000000e-01 : f32
    %185 = vector.broadcast %cst_130 : f32 to vector<4x128xf32>
    %186 = arith.addf %184, %185 : vector<4x128xf32>
    %187 = arith.select %178, %182, %186 : vector<4x128xi1>, vector<4x128xf32>
    %188 = vector.extract_strided_slice %187 {offsets = [0, 0], sizes = [4, 32], strides = [1, 1]} : vector<4x128xf32> to vector<4x32xf32>
    %189 = vector.extract_strided_slice %187 {offsets = [0, 32], sizes = [4, 32], strides = [1, 1]} : vector<4x128xf32> to vector<4x32xf32>
    %190 = vector.extract_strided_slice %187 {offsets = [0, 64], sizes = [4, 32], strides = [1, 1]} : vector<4x128xf32> to vector<4x32xf32>
    %191 = vector.extract_strided_slice %187 {offsets = [0, 96], sizes = [4, 32], strides = [1, 1]} : vector<4x128xf32> to vector<4x32xf32>
    %192 = arith.mulf %189, %159 : vector<4x32xf32>
    %193 = arith.mulf %188, %190 : vector<4x32xf32>
    %194 = arith.addf %192, %193 : vector<4x32xf32>
    %195 = math.tanh %194 : vector<4x32xf32>
    %196 = arith.mulf %191, %195 : vector<4x32xf32>
    %c0_131 = arith.constant 0 : index
    %c0_132 = arith.constant 0 : index
    %197 = vector.load %arg21[%c0_131, %c0_132] : memref<4x32xf32, #tpu.memory_space<vmem>>, vector<4x32xf32>
    tpu.vector_store %arg21[%c0_131, %c0_132], %196 {strides = array<i32>} : memref<4x32xf32, #tpu.memory_space<vmem>>, vector<4x32xf32>,
    %c0_133 = arith.constant 0 : index
    %c0_134 = arith.constant 0 : index
    %198 = vector.load %arg22[%c0_133, %c0_134] : memref<4x32xf32, #tpu.memory_space<vmem>>, vector<4x32xf32>
    tpu.vector_store %arg22[%c0_133, %c0_134], %194 {strides = array<i32>} : memref<4x32xf32, #tpu.memory_space<vmem>>, vector<4x32xf32>,
    return
  }
}

</mosaic_0001>

<llo_original>
// kernel: tpu_custom_call.1
$region0: #{tpu_custom_call.1}
  #allocation0 [shape = 'u32[]', space=smem, size = 0x4, offset = 0x4, fixed_abs, tag = 'smem constant byte address 0x4 - core index']
  #allocation1 [shape = 'u32[72,128]{1,0:T(1,128)}', space=vmem, size = 0x9000, scoped, tag = 'internal scratch']
  #allocation2 [shape = 'f32[4,32]{1,0:T(4,128)}', space=vmem, size = 0x800, scoped, tag = 'scratch operand']
  #allocation3 [shape = 'f32[4,16]{1,0:T(4,128)}', space=vmem, size = 0x800, scoped, tag = 'scratch operand']
  %s0 = inlined_call_operand.vmem [shape: s32[4,4], index: 0, kind: input, shape index: {}]
  %s1 = inlined_call_operand.vmem [shape: s32[4], index: 1, kind: input, shape index: {}]
  %s2 = inlined_call_operand.vmem [shape: f32[32,32], index: 2, kind: input, shape index: {}]
  %s3 = inlined_call_operand.vmem [shape: f32[32,16], index: 3, kind: input, shape index: {}]
  %s4 = inlined_call_operand.vmem [shape: f32[4,8,32], index: 4, kind: input, shape index: {}]
  %s5 = inlined_call_operand.vmem [shape: f32[4,32], index: 5, kind: input, shape index: {}]
  %s6 = inlined_call_operand.vmem [shape: f32[4,1], index: 6, kind: input, shape index: {}]
  %s7 = inlined_call_operand.vmem [shape: f32[4,32], index: 7, kind: input, shape index: {}]
  %s8 = inlined_call_operand.vmem [shape: f32[4,32], index: 8, kind: input, shape index: {}]
  %s9 = inlined_call_operand.vmem [shape: f32[4,32], index: 9, kind: input, shape index: {}]
  %s10 = inlined_call_operand.vmem [shape: f32[96,32], index: 10, kind: input, shape index: {}]
  %s11 = inlined_call_operand.vmem [shape: f32[32,64], index: 11, kind: input, shape index: {}]
  %s12 = inlined_call_operand.vmem [shape: f32[1,64], index: 12, kind: input, shape index: {}]
  %s13 = inlined_call_operand.vmem [shape: f32[64,32], index: 13, kind: input, shape index: {}]
  %s14 = inlined_call_operand.vmem [shape: f32[1,32], index: 14, kind: input, shape index: {}]
  %s15 = inlined_call_operand.vmem [shape: f32[16,128], index: 15, kind: input, shape index: {}]
  %s16 = inlined_call_operand.vmem [shape: f32[1,128], index: 16, kind: input, shape index: {}]
  %s17 = inlined_call_operand.vmem [shape: f32[32,128], index: 17, kind: input, shape index: {}]
  %s18 = inlined_call_operand.vmem [shape: f32[1,128], index: 18, kind: input, shape index: {}]
  %s19 = inlined_call_operand.hbm [shape: f32[4,32], index: 19, kind: output, shape index: {0}]
  %s20 = inlined_call_operand.vmem [shape: s32[4,1], index: 20, kind: output, shape index: {1}]
  %s21 = inlined_call_operand.hbm [shape: f32[4,32], index: 21, kind: output, shape index: {2}]
  %s22 = inlined_call_operand.hbm [shape: f32[4,32], index: 22, kind: output, shape index: {3}]
  %23 = xla_tuple %s19, %s20, %s21, %s22
  %s24 = sld [smem:[#allocation0]]
  $region118: #{tpu_custom_call.1} parent=0
    _
  %s26 = ssub.s32 1, %s24
  %s27 = scalar_select 0, %s26, %s24
  $region1: #{tpu_custom_call.1} parent=0
    #allocation4 [shape = 'u8[2048]{0}', space=smem, size = 0x800, scoped, tag = 'input window, operand 0, single buffered']
    #allocation5 [shape = 's32[1]{0}', space=sflag, size = 0x4, scoped, tag = 'scoped memory for tpu_custom_call.1']
    #allocation6 [shape = 's32[1]{0}', space=sflag, size = 0x4, scoped, tag = 'scoped memory for tpu_custom_call.1']
    #allocation7 [shape = 'u8[512]{0}', space=smem, size = 0x200, scoped, tag = 'input window, operand 1, single buffered']
    #allocation8 [shape = 's32[1]{0}', space=sflag, size = 0x4, scoped, tag = 'scoped memory for tpu_custom_call.1']
    #allocation9 [shape = 'u8[2048]{0}', space=vmem, size = 0x800, scoped, tag = 'output window, operand 0, single buffered']
    #allocation10 [shape = 'u8[2048]{0}', space=vmem, size = 0x800, scoped, tag = 'output window, operand 2, single buffered']
    #allocation11 [shape = 's32[1]{0}', space=sflag, size = 0x4, scoped, tag = 'scoped memory for tpu_custom_call.1']
    #allocation12 [shape = 'u8[2048]{0}', space=vmem, size = 0x800, scoped, tag = 'output window, operand 3, single buffered']
    %28 = vsyncpa [#allocation6], 0
    %29 = vsyncpa [#allocation8], 0
    %30 = vsyncpa [#allocation5], 0
    %31 = vsyncpa [#allocation11], 0
    // Predicated region
    $region2: #{tpu_custom_call.1} parent=1 // pred_check
      _
    $region3: #{tpu_custom_call.1} parent=1 // pred_check_branch
      %33 = sbr.rel (0) target = $region5
    $region4: #{tpu_custom_call.1} parent=1 // pred_region
      %35 = vsyncadd [#allocation6], 0
      %s37 = sshll.u32 %s0, 4
      %s38 = int_to_ptr.vmem [resolvable:$true] %s37
      %40 = dma.vmem_to_smem %s38, 64, [#allocation4], [#allocation6]
    $region5: #{tpu_custom_call.1} parent=1 // pred_fallthru
      _
    // Predicated region
    $region6: #{tpu_custom_call.1} parent=1 // pred_check
      _
    $region7: #{tpu_custom_call.1} parent=1 // pred_check_branch
      %42 = sbr.rel (0) target = $region9
    $region8: #{tpu_custom_call.1} parent=1 // pred_region
      %44 = vsyncadd [#allocation8], 0
      %s46 = sshll.u32 %s1, 4
      %s47 = int_to_ptr.vmem [resolvable:$true] %s46
      %49 = dma.vmem_to_smem %s47, 16, [#allocation7], [#allocation8]
    $region9: #{tpu_custom_call.1} parent=1 // pred_fallthru
      _
    // Predicated region
    $region10: #{tpu_custom_call.1} parent=1 // pred_check
      _
    $region11: #{tpu_custom_call.1} parent=1 // pred_check_branch
      %51 = sbr.rel (0) target = $region13
    $region12: #{tpu_custom_call.1} parent=1 // pred_region
      _
    $region13: #{tpu_custom_call.1} parent=1 // pred_fallthru
      _
    // Predicated region
    $region14: #{tpu_custom_call.1} parent=1 // pred_check
      _
    $region15: #{tpu_custom_call.1} parent=1 // pred_check_branch
      %53 = sbr.rel (0) target = $region17
    $region16: #{tpu_custom_call.1} parent=1 // pred_region
      _
    $region17: #{tpu_custom_call.1} parent=1 // pred_fallthru
      _
    // Predicated region
    $region18: #{tpu_custom_call.1} parent=1 // pred_check
      _
    $region19: #{tpu_custom_call.1} parent=1 // pred_check_branch
      %55 = sbr.rel (0) target = $region21
    $region20: #{tpu_custom_call.1} parent=1 // pred_region
      _
    $region21: #{tpu_custom_call.1} parent=1 // pred_fallthru
      _
    // Predicated region
    $region22: #{tpu_custom_call.1} parent=1 // pred_check
      _
    $region23: #{tpu_custom_call.1} parent=1 // pred_check_branch
      %57 = sbr.rel (0) target = $region25
    $region24: #{tpu_custom_call.1} parent=1 // pred_region
      _
    $region25: #{tpu_custom_call.1} parent=1 // pred_fallthru
      _
    // Predicated region
    $region26: #{tpu_custom_call.1} parent=1 // pred_check
      _
    $region27: #{tpu_custom_call.1} parent=1 // pred_check_branch
      %59 = sbr.rel (0) target = $region29
    $region28: #{tpu_custom_call.1} parent=1 // pred_region
      _
    $region29: #{tpu_custom_call.1} parent=1 // pred_fallthru
      _
    // Predicated region
    $region30: #{tpu_custom_call.1} parent=1 // pred_check
      _
    $region31: #{tpu_custom_call.1} parent=1 // pred_check_branch
      %61 = sbr.rel (0) target = $region33
    $region32: #{tpu_custom_call.1} parent=1 // pred_region
      _
    $region33: #{tpu_custom_call.1} parent=1 // pred_fallthru
      _
    // Predicated region
    $region34: #{tpu_custom_call.1} parent=1 // pred_check
      _
    $region35: #{tpu_custom_call.1} parent=1 // pred_check_branch
      %63 = sbr.rel (0) target = $region37
    $region36: #{tpu_custom_call.1} parent=1 // pred_region
      _
    $region37: #{tpu_custom_call.1} parent=1 // pred_fallthru
      _
    // Predicated region
    $region38: #{tpu_custom_call.1} parent=1 // pred_check
      _
    $region39: #{tpu_custom_call.1} parent=1 // pred_check_branch
      %65 = sbr.rel (0) target = $region41
    $region40: #{tpu_custom_call.1} parent=1 // pred_region
      _
    $region41: #{tpu_custom_call.1} parent=1 // pred_fallthru
      _
    // Predicated region
    $region42: #{tpu_custom_call.1} parent=1 // pred_check
      _
    $region43: #{tpu_custom_call.1} parent=1 // pred_check_branch
      %67 = sbr.rel (0) target = $region45
    $region44: #{tpu_custom_call.1} parent=1 // pred_region
      _
    $region45: #{tpu_custom_call.1} parent=1 // pred_fallthru
      _
    // Predicated region
    $region46: #{tpu_custom_call.1} parent=1 // pred_check
      _
    $region47: #{tpu_custom_call.1} parent=1 // pred_check_branch
      %69 = sbr.rel (0) target = $region49
    $region48: #{tpu_custom_call.1} parent=1 // pred_region
      _
    $region49: #{tpu_custom_call.1} parent=1 // pred_fallthru
      _
    // Predicated region
    $region50: #{tpu_custom_call.1} parent=1 // pred_check
      _
    $region51: #{tpu_custom_call.1} parent=1 // pred_check_branch
      %71 = sbr.rel (0) target = $region53
    $region52: #{tpu_custom_call.1} parent=1 // pred_region
      _
    $region53: #{tpu_custom_call.1} parent=1 // pred_fallthru
      _
    // Predicated region
    $region54: #{tpu_custom_call.1} parent=1 // pred_check
      _
    $region55: #{tpu_custom_call.1} parent=1 // pred_check_branch
      %73 = sbr.rel (0) target = $region57
    $region56: #{tpu_custom_call.1} parent=1 // pred_region
      _
    $region57: #{tpu_custom_call.1} parent=1 // pred_fallthru
      _
    // Predicated region
    $region58: #{tpu_custom_call.1} parent=1 // pred_check
      _
    $region59: #{tpu_custom_call.1} parent=1 // pred_check_branch
      %75 = sbr.rel (0) target = $region61
    $region60: #{tpu_custom_call.1} parent=1 // pred_region
      _
    $region61: #{tpu_custom_call.1} parent=1 // pred_fallthru
      _
    // Predicated region
    $region62: #{tpu_custom_call.1} parent=1 // pred_check
      _
    $region63: #{tpu_custom_call.1} parent=1 // pred_check_branch
      %77 = sbr.rel (0) target = $region65
    $region64: #{tpu_custom_call.1} parent=1 // pred_region
      _
    $region65: #{tpu_custom_call.1} parent=1 // pred_fallthru
      _
    // Predicated region
    $region66: #{tpu_custom_call.1} parent=1 // pred_check
      _
    $region67: #{tpu_custom_call.1} parent=1 // pred_check_branch
      %79 = sbr.rel (0) target = $region69
    $region68: #{tpu_custom_call.1} parent=1 // pred_region
      _
    $region69: #{tpu_custom_call.1} parent=1 // pred_fallthru
      _
    // Predicated region
    $region70: #{tpu_custom_call.1} parent=1 // pred_check
      _
    $region71: #{tpu_custom_call.1} parent=1 // pred_check_branch
      %81 = sbr.rel (0) target = $region73
    $region72: #{tpu_custom_call.1} parent=1 // pred_region
      _
    $region73: #{tpu_custom_call.1} parent=1 // pred_fallthru
      _
    // Predicated region
    $region74: #{tpu_custom_call.1} parent=1 // pred_check
      _
    $region75: #{tpu_custom_call.1} parent=1 // pred_check_branch
      %83 = sbr.rel (0) target = $region77
    $region76: #{tpu_custom_call.1} parent=1 // pred_region
      _
    $region77: #{tpu_custom_call.1} parent=1 // pred_fallthru
      _
    // Predicated region
    $region78: #{tpu_custom_call.1} parent=1 // pred_check
      _
    $region79: #{tpu_custom_call.1} parent=1 // pred_check_branch
      %85 = sbr.rel (0) target = $region81
    $region80: #{tpu_custom_call.1} parent=1 // pred_region
      %87 = dma.done [#allocation6], 64
    $region81: #{tpu_custom_call.1} parent=1 // pred_fallthru
      _
    // Predicated region
    $region82: #{tpu_custom_call.1} parent=1 // pred_check
      _
    $region83: #{tpu_custom_call.1} parent=1 // pred_check_branch
      %89 = sbr.rel (0) target = $region85
    $region84: #{tpu_custom_call.1} parent=1 // pred_region
      %91 = dma.done [#allocation8], 16
    $region85: #{tpu_custom_call.1} parent=1 // pred_fallthru
      _
    %92 = sfence
    %s93 = sld [smem:[#allocation4]]
    %s94 = scalar_lea.vmem %s2, %s93
    %v95 = vld [vmem:[%s94] sm:$0x1]
    %s96 = sld [smem:[#allocation4 + $0x1]]
    %s97 = scalar_lea.vmem %s2, %s96
    %v98 = vld [vmem:[%s97] sm:$0x1]
    %v99 = vadd.f32 %v95, %v98
    %s100 = sld [smem:[#allocation4 + $0x2]]
    %s101 = scalar_lea.vmem %s2, %s100
    %v102 = vld [vmem:[%s101] sm:$0x1]
    %v103 = vadd.f32 %v99, %v102
    %s104 = sld [smem:[#allocation4 + $0x3]]
    %s105 = scalar_lea.vmem %s2, %s104
    %v106 = vld [vmem:[%s105] sm:$0x1]
    %v107 = vadd.f32 %v103, %v106
    %v108 = vmul.f32 %v107, 0.25
    %vm109 = vcmask 253952
    %110 = vst.msk [vmem:[#allocation2] sm:$0x1] %vm109, %v108
    %s111 = sld [smem:[#allocation7]]
    %s112 = scalar_lea.vmem %s3, %s111
    %v113 = vld [vmem:[%s112] sm:$0x1]
    %vm114 = vcmask 122880
    %115 = vst.msk [vmem:[#allocation3] sm:$0x1] %vm114, %v113
    %s116 = sld [smem:[#allocation4 + $0x80]]
    %s117 = scalar_lea.vmem %s2, %s116
    %v118 = vld [vmem:[%s117] sm:$0x1]
    %s119 = sld [smem:[#allocation4 + $0x81]]
    %s120 = scalar_lea.vmem %s2, %s119
    %v121 = vld [vmem:[%s120] sm:$0x1]
    %v122 = vadd.f32 %v118, %v121
    %s123 = sld [smem:[#allocation4 + $0x82]]
    %s124 = scalar_lea.vmem %s2, %s123
    %v125 = vld [vmem:[%s124] sm:$0x1]
    %v126 = vadd.f32 %v122, %v125
    %s127 = sld [smem:[#allocation4 + $0x83]]
    %s128 = scalar_lea.vmem %s2, %s127
    %v129 = vld [vmem:[%s128] sm:$0x1]
    %v130 = vadd.f32 %v126, %v129
    %v131 = vmul.f32 %v130, 0.25
    %132 = vst.msk [vmem:[#allocation2 + $0x1] sm:$0x1] %vm109, %v131
    %s133 = sld [smem:[#allocation7 + $0x1]]
    %s134 = scalar_lea.vmem %s3, %s133
    %v135 = vld [vmem:[%s134] sm:$0x1]
    %136 = vst.msk [vmem:[#allocation3 + $0x1] sm:$0x1] %vm114, %v135
    %s137 = sld [smem:[#allocation4 + $0x100]]
    %s138 = scalar_lea.vmem %s2, %s137
    %v139 = vld [vmem:[%s138] sm:$0x1]
    %s140 = sld [smem:[#allocation4 + $0x101]]
    %s141 = scalar_lea.vmem %s2, %s140
    %v142 = vld [vmem:[%s141] sm:$0x1]
    %v143 = vadd.f32 %v139, %v142
    %s144 = sld [smem:[#allocation4 + $0x102]]
    %s145 = scalar_lea.vmem %s2, %s144
    %v146 = vld [vmem:[%s145] sm:$0x1]
    %v147 = vadd.f32 %v143, %v146
    %s148 = sld [smem:[#allocation4 + $0x103]]
    %s149 = scalar_lea.vmem %s2, %s148
    %v150 = vld [vmem:[%s149] sm:$0x1]
    %v151 = vadd.f32 %v147, %v150
    %v152 = vmul.f32 %v151, 0.25
    %153 = vst.msk [vmem:[#allocation2 + $0x2] sm:$0x1] %vm109, %v152
    %s154 = sld [smem:[#allocation7 + $0x2]]
    %s155 = scalar_lea.vmem %s3, %s154
    %v156 = vld [vmem:[%s155] sm:$0x1]
    %157 = vst.msk [vmem:[#allocation3 + $0x2] sm:$0x1] %vm114, %v156
    %s158 = sld [smem:[#allocation4 + $0x180]]
    %s159 = scalar_lea.vmem %s2, %s158
    %v160 = vld [vmem:[%s159] sm:$0x1]
    %s161 = sld [smem:[#allocation4 + $0x181]]
    %s162 = scalar_lea.vmem %s2, %s161
    %v163 = vld [vmem:[%s162] sm:$0x1]
    %v164 = vadd.f32 %v160, %v163
    %s165 = sld [smem:[#allocation4 + $0x182]]
    %s166 = scalar_lea.vmem %s2, %s165
    %v167 = vld [vmem:[%s166] sm:$0x1]
    %v168 = vadd.f32 %v164, %v167
    %s169 = sld [smem:[#allocation4 + $0x183]]
    %s170 = scalar_lea.vmem %s2, %s169
    %v171 = vld [vmem:[%s170] sm:$0x1]
    %v172 = vadd.f32 %v168, %v171
    %v173 = vmul.f32 %v172, 0.25
    %174 = vst.msk [vmem:[#allocation2 + $0x3] sm:$0x1] %vm109, %v173
    %s175 = sld [smem:[#allocation7 + $0x3]]
    %s176 = scalar_lea.vmem %s3, %s175
    %v177 = vld [vmem:[%s176] sm:$0x1]
    %178 = vst.msk [vmem:[#allocation3 + $0x3] sm:$0x1] %vm114, %v177
    %v179 = vld [vmem:[%s2] sm:$0xff]
    %v180 = vld [vmem:[%s2 + $0x8] sm:$0xff]
    %v181 = vld [vmem:[%s2 + $0x10] sm:$0xff]
    %v182 = vld [vmem:[%s2 + $0x18] sm:$0xff]
    %vm183 = vcmask 261120
    %v184 = vsel %vm183, %v179, 0.0
    %v185 = vsel %vm183, %v180, 0.0
    %v186 = vadd.f32 %v184, %v185
    %v187 = vsel %vm183, %v181, 0.0
    %v188 = vadd.f32 %v186, %v187
    %v189 = vsel %vm183, %v182, 0.0
    %v190 = vadd.f32 %v188, %v189
    %v191 = vrot.slane %v190, 4
    %v192 = vadd.f32 %v190, %v191
    %v193 = vrot.slane %v192, 2
    %v194 = vadd.f32 %v192, %v193
    %v195 = vrot.slane %v194, 1
    %v196 = vadd.f32 %v194, %v195
    %v197 = vrcp.pop 32.0
    %v198 = vmul.f32 32.0, %v197
    %v199 = vsub.f32 1.0, %v198
    %v200 = vmul.f32 %v197, %v199
    %v201 = vadd.f32 %v197, %v200
    %vm202 = vweird.f32 %v197
    %v203 = vsel %vm202, %v197, %v201
    %v204 = vmul.f32 %v196, %v203
    %v205 = vld [vmem:[#allocation2] sm:$0xf]
    %v206 = vadd.f32 %v205, %v204
    %v207 = vld [vmem:[%s5] sm:$0xf]
    %v208 = vld [vmem:[%s4] sm:$0xff]
    %v209 = vld [vmem:[%s4 + $0x8] sm:$0xff]
    %v210 = vld [vmem:[%s4 + $0x10] sm:$0xff]
    %v211 = vld [vmem:[%s4 + $0x18] sm:$0xff]
    %v213 = vrot.slane %v207, 1
    %v214 = vrot.slane %v207, 2
    %v215 = vrot.slane %v207, 3
    %v216 = vperm.slane %v207, 0
    %v217 = vperm.slane %v213, 0
    %v218 = vperm.slane %v214, 0
    %v219 = vperm.slane %v215, 0
    %v224 = vmul.f32 %v216, %v208
    %v225 = vmul.f32 %v217, %v209
    %v226 = vmul.f32 %v218, %v210
    %v227 = vmul.f32 %v219, %v211
    %v228 = vsel %vm183, %v224, 0.0
    %229 = vadd.xlane.f32.xlu0 %v228
    %v230 = vpop.xlane.xlu0 %229
    %v231 = vsel %vm183, %v225, 0.0
    %232 = vadd.xlane.f32.xlu0 %v231
    %v233 = vpop.xlane.xlu0 %232
    %v234 = vsel %vm183, %v226, 0.0
    %235 = vadd.xlane.f32.xlu0 %v234
    %v236 = vpop.xlane.xlu0 %235
    %v237 = vsel %vm183, %v227, 0.0
    %238 = vadd.xlane.f32.xlu0 %v237
    %v239 = vpop.xlane.xlu0 %238
    %v240 = vmul.f32 %v230, 0.17677669
    %v241 = vmul.f32 %v233, 0.17677669
    %v242 = vmul.f32 %v236, 0.17677669
    %v243 = vmul.f32 %v239, 0.17677669
    %v248 = vlaneseq
    %v249 = vand.u32 %v248, 127
    %v250 = vperm.slane %v240, %v249
    %v251 = vperm.slane %v241, %v249
    %v252 = vperm.slane %v242, %v249
    %v253 = vperm.slane %v243, %v249
    %vm254 = vcmask 1041409
    %v255 = vsel %vm254, %v251, %v250
    %vm256 = vcmask 1042434
    %v257 = vsel %vm256, %v252, %v255
    %vm258 = vcmask 1043459
    %v259 = vsel %vm258, %v253, %v257
    %vm261 = vcmask 60416
    %v262 = vsel %vm261, %v259, -inf
    %263 = vmax.xlane.f32.xlu0 %v262
    %v264 = vpop.xlane.xlu0 %263
    %v266 = vperm.slane %v264, 0
    %v267 = vperm.slane %v264, 1
    %v268 = vperm.slane %v264, 2
    %v269 = vperm.slane %v264, 3
    %v274 = vsub.f32 %v240, %v266
    %v275 = vsub.f32 %v241, %v267
    %v276 = vsub.f32 %v242, %v268
    %v277 = vsub.f32 %v243, %v269
    %v278 = vmul.f32 %v274, 1.442695
    %v279 = vpow.pop %v278
    %v280 = vmul.f32 %v275, 1.442695
    %v281 = vpow.pop %v280
    %v282 = vmul.f32 %v276, 1.442695
    %v283 = vpow.pop %v282
    %v284 = vmul.f32 %v277, 1.442695
    %v285 = vpow.pop %v284
    %290 = vset.pattern.permute.xlu0 0
    %291 = vperm.xlu0 %290, %v279
    %v292 = vpop.permute.xlu0 %291
    %293 = vset.pattern.permute.xlu0 0
    %294 = vperm.xlu0 %293, %v281
    %v295 = vpop.permute.xlu0 %294
    %296 = vset.pattern.permute.xlu0 0
    %297 = vperm.xlu0 %296, %v283
    %v298 = vpop.permute.xlu0 %297
    %299 = vset.pattern.permute.xlu0 0
    %300 = vperm.xlu0 %299, %v285
    %v301 = vpop.permute.xlu0 %300
    %v302 = vperm.slane %v292, %v249
    %v303 = vperm.slane %v295, %v249
    %v304 = vperm.slane %v298, %v249
    %v305 = vperm.slane %v301, %v249
    %v306 = vsel %vm254, %v303, %v302
    %v307 = vsel %vm256, %v304, %v306
    %v308 = vsel %vm258, %v305, %v307
    %v310 = vsel %vm261, %v308, 0.0
    %311 = vadd.xlane.f32.xlu0 %v310
    %v312 = vpop.xlane.xlu0 %311
    %v313 = vrcp.pop %v312
    %v315 = vperm.slane %v313, 0
    %v316 = vperm.slane %v313, 1
    %v317 = vperm.slane %v313, 2
    %v318 = vperm.slane %v313, 3
    %v323 = vmul.f32 %v279, %v315
    %v324 = vmul.f32 %v281, %v316
    %v325 = vmul.f32 %v283, %v317
    %v326 = vmul.f32 %v285, %v318
    %328 = vset.pattern.permute.xlu0 0
    %329 = vperm.xlu0 %328, %v323
    %v330 = vpop.permute.xlu0 %329
    %333 = vset.pattern.permute.xlu0 0
    %334 = vperm.xlu0 %333, %v324
    %v335 = vpop.permute.xlu0 %334
    %338 = vset.pattern.permute.xlu0 0
    %339 = vperm.xlu0 %338, %v325
    %v340 = vpop.permute.xlu0 %339
    %343 = vset.pattern.permute.xlu0 0
    %344 = vperm.xlu0 %343, %v326
    %v345 = vpop.permute.xlu0 %344
    %v347 = vmul.f32 %v330, %v208
    %v348 = vmul.f32 %v335, %v209
    %v349 = vmul.f32 %v340, %v210
    %v350 = vmul.f32 %v345, %v211
    %v351 = vsel %vm183, %v347, 0.0
    %v352 = vrot.slane %v351, 4
    %v353 = vadd.f32 %v351, %v352
    %v354 = vrot.slane %v353, 2
    %v355 = vadd.f32 %v353, %v354
    %v356 = vrot.slane %v355, 1
    %v357 = vadd.f32 %v355, %v356
    %v358 = vsel %vm183, %v348, 0.0
    %v359 = vrot.slane %v358, 4
    %v360 = vadd.f32 %v358, %v359
    %v361 = vrot.slane %v360, 2
    %v362 = vadd.f32 %v360, %v361
    %v363 = vrot.slane %v362, 1
    %v364 = vadd.f32 %v362, %v363
    %v365 = vsel %vm183, %v349, 0.0
    %v366 = vrot.slane %v365, 4
    %v367 = vadd.f32 %v365, %v366
    %v368 = vrot.slane %v367, 2
    %v369 = vadd.f32 %v367, %v368
    %v370 = vrot.slane %v369, 1
    %v371 = vadd.f32 %v369, %v370
    %v372 = vsel %vm183, %v350, 0.0
    %v373 = vrot.slane %v372, 4
    %v374 = vadd.f32 %v372, %v373
    %v375 = vrot.slane %v374, 2
    %v376 = vadd.f32 %v374, %v375
    %v377 = vrot.slane %v376, 1
    %v378 = vadd.f32 %v376, %v377
    %v383 = vsel %vm254, %v364, %v357
    %v384 = vsel %vm256, %v371, %v383
    %v385 = vsel %vm258, %v378, %v384
    %386 = vrot.lane.b32.xlu0 %v385, 32
    %v387 = vpop.permute.xlu0 %386
    %389 = vrot.lane.b32.xlu0 %v207, 64
    %v390 = vpop.permute.xlu0 %389
    %v392 = vsel %vm183, %v206, %v387
    %vm393 = vcmask 523264
    %v394 = vsel %vm393, %v392, %v390
    %v395 = vld [vmem:[%s10] sm:$0xff]
    %v396 = vld [vmem:[%s10 + $0x8] sm:$0xff]
    %v397 = vld [vmem:[%s10 + $0x10] sm:$0xff]
    %v398 = vld [vmem:[%s10 + $0x18] sm:$0xff]
    %v399 = vld [vmem:[%s10 + $0x20] sm:$0xff]
    %v400 = vld [vmem:[%s10 + $0x28] sm:$0xff]
    %v401 = vld [vmem:[%s10 + $0x30] sm:$0xff]
    %v402 = vld [vmem:[%s10 + $0x38] sm:$0xff]
    %v403 = vld [vmem:[%s10 + $0x40] sm:$0xff]
    %v404 = vld [vmem:[%s10 + $0x48] sm:$0xff]
    %v405 = vld [vmem:[%s10 + $0x50] sm:$0xff]
    %v406 = vld [vmem:[%s10 + $0x58] sm:$0xff]
    %vm407 = vcmask 785408
    %v409 = vsel %vm407, %v394, 0
    %411 = vmatpush.msra.mxu0 0.0
    %412 = vmatpush.msra.mxu0 0.0
    %413 = vmatpush.msra.mxu0 0.0
    %414 = vmatpush.msra.mxu0 0.0
    %415 = vmatpush.msra.mxu0 %v406
    %416 = vmatpush.msra.mxu0 %v405
    %417 = vmatpush.msra.mxu0 %v404
    %418 = vmatpush.msra.mxu0 %v403
    %419 = vmatpush.msra.mxu0 %v402
    %420 = vmatpush.msra.mxu0 %v401
    %421 = vmatpush.msra.mxu0 %v400
    %422 = vmatpush.msra.mxu0 %v399
    %423 = vmatpush.msra.mxu0 %v398
    %424 = vmatpush.msra.mxu0 %v397
    %425 = vmatpush.msra.mxu0 %v396
    %426 = vmatpush.msra.mxu0 %v395
    %427 = vmatmul.f32.gmra.mxu0 %v409
    %v428 = vpop.f32.mrf.mxu0
    %v429 = vadd.f32 0.0, %v428
    %430 = vdwg.mxu0
    %v431 = vld [vmem:[%s11] sm:$0xff]
    %v432 = vld [vmem:[%s11 + $0x8] sm:$0xff]
    %v433 = vld [vmem:[%s11 + $0x10] sm:$0xff]
    %v434 = vld [vmem:[%s11 + $0x18] sm:$0xff]
    %v435 = vld [vmem:[%s12] sm:$0x1]
    %v437 = vperm.slane %v435, 0
    %v440 = vsel %vm183, %v429, 0
    %442 = vmatpush.msra.mxu0 0.0
    %443 = vmatpush.msra.mxu0 0.0
    %444 = vmatpush.msra.mxu0 0.0
    %445 = vmatpush.msra.mxu0 0.0
    %446 = vmatpush.msra.mxu0 0.0
    %447 = vmatpush.msra.mxu0 0.0
    %448 = vmatpush.msra.mxu0 0.0
    %449 = vmatpush.msra.mxu0 0.0
    %450 = vmatpush.msra.mxu0 0.0
    %451 = vmatpush.msra.mxu0 0.0
    %452 = vmatpush.msra.mxu0 0.0
    %453 = vmatpush.msra.mxu0 0.0
    %454 = vmatpush.msra.mxu0 %v434
    %455 = vmatpush.msra.mxu0 %v433
    %456 = vmatpush.msra.mxu0 %v432
    %457 = vmatpush.msra.mxu0 %v431
    %458 = vmatmul.f32.gmra.mxu0 %v440
    %v459 = vpop.f32.mrf.mxu0
    %v460 = vadd.f32 %v437, %v459
    %461 = vdwg.mxu0
    %v462 = vld [vmem:[%s13] sm:$0xff]
    %v463 = vld [vmem:[%s13 + $0x8] sm:$0xff]
    %v464 = vld [vmem:[%s13 + $0x10] sm:$0xff]
    %v465 = vld [vmem:[%s13 + $0x18] sm:$0xff]
    %v466 = vld [vmem:[%s13 + $0x20] sm:$0xff]
    %v467 = vld [vmem:[%s13 + $0x28] sm:$0xff]
    %v468 = vld [vmem:[%s13 + $0x30] sm:$0xff]
    %v469 = vld [vmem:[%s13 + $0x38] sm:$0xff]
    %v470 = vld [vmem:[%s14] sm:$0x1]
    %v472 = vperm.slane %v470, 0
    %v475 = vsel %vm393, %v460, 0
    %477 = vmatpush.msra.mxu0 0.0
    %478 = vmatpush.msra.mxu0 0.0
    %479 = vmatpush.msra.mxu0 0.0
    %480 = vmatpush.msra.mxu0 0.0
    %481 = vmatpush.msra.mxu0 0.0
    %482 = vmatpush.msra.mxu0 0.0
    %483 = vmatpush.msra.mxu0 0.0
    %484 = vmatpush.msra.mxu0 0.0
    %485 = vmatpush.msra.mxu0 %v469
    %486 = vmatpush.msra.mxu0 %v468
    %487 = vmatpush.msra.mxu0 %v467
    %488 = vmatpush.msra.mxu0 %v466
    %489 = vmatpush.msra.mxu0 %v465
    %490 = vmatpush.msra.mxu0 %v464
    %491 = vmatpush.msra.mxu0 %v463
    %492 = vmatpush.msra.mxu0 %v462
    %493 = vmatmul.f32.gmra.mxu0 %v475
    %v494 = vpop.f32.mrf.mxu0
    %v495 = vadd.f32 %v472, %v494
    %496 = vdwg.mxu0
    %vm497 = vcmask 257024
    %v498 = vsel %vm497, %v495, -inf
    %499 = vmax.xlane.f32.xlu0 %v498
    %v500 = vpop.xlane.xlu0 %499
    %v501 = vsub.f32 %v495, %v500
    %v502 = vmul.f32 %v501, 1.442695
    %v503 = vpow.pop %v502
    %v504 = vsel %vm497, %v503, 0.0
    %505 = vadd.xlane.f32.xlu0 %v504
    %v506 = vpop.xlane.xlu0 %505
    %v507 = vrcp.pop %v506
    %v508 = vmul.f32 %v503, %v507
    %509 = vst.msk [vmem:[#allocation9] sm:$0xf] %vm497, %v508
    %v510 = vld [vmem:[%s9] sm:$0xf]
    %v511 = vadd.f32 %v501, %v510
    %v512 = vsel %vm497, %v511, -inf
    %513 = vmax.xlane.f32.xlu0 %v512
    %v514 = vpop.xlane.xlu0 %513
    %vm515 = vcmp.ge.f32.partialorder %v511, %v514
    %v516 = vsel %vm515, %v249, 32
    %v517 = vsel %vm497, %v516, 2147483647
    %v518 = vand.u32 %v517, 65535
    %v519 = vshra.s32 %v517, 16
    %v520 = vcvt.s32.f32 %v518
    %v521 = vcvt.s32.f32 %v519
    %522 = vmin.xlane.f32.xlu0 %v521
    %v523 = vpop.xlane.xlu0 %522
    %vm524 = vcmp.eq.f32.partialorder %v521, %v523
    %v525 = vsel %vm524, %v520, inf
    %526 = vmin.xlane.f32.xlu0 %v525
    %v527 = vpop.xlane.xlu0 %526
    %v528 = vcvt.f32.s32 %v527
    %v529 = vcvt.f32.s32 %v523
    %v530 = vshll.u32 %v529, 16
    %v531 = vadd.s32 %v530, %v528
    %vm532 = vcmask 3072
    %533 = vst.msk [vmem:[%s20] sm:$0xf] %vm532, %v531
    %v534 = vld [vmem:[#allocation3] sm:$0xf]
    %v535 = vld [vmem:[%s6] sm:$0xf]
    %v536 = vld [vmem:[%s7] sm:$0xf]
    %v537 = vld [vmem:[%s8] sm:$0xf]
    %v538 = vld [vmem:[%s15] sm:$0xff]
    %v539 = vld [vmem:[%s15 + $0x8] sm:$0xff]
    %v540 = vld [vmem:[%s17] sm:$0xff]
    %v541 = vld [vmem:[%s17 + $0x8] sm:$0xff]
    %v542 = vld [vmem:[%s17 + $0x10] sm:$0xff]
    %v543 = vld [vmem:[%s17 + $0x18] sm:$0xff]
    %v545 = vsel %vm183, %v536, 0
    %547 = vmatpush.msra.mxu0 0.0
    %548 = vmatpush.msra.mxu0 0.0
    %549 = vmatpush.msra.mxu0 0.0
    %550 = vmatpush.msra.mxu0 0.0
    %551 = vmatpush.msra.mxu0 0.0
    %552 = vmatpush.msra.mxu0 0.0
    %553 = vmatpush.msra.mxu0 0.0
    %554 = vmatpush.msra.mxu0 0.0
    %555 = vmatpush.msra.mxu0 0.0
    %556 = vmatpush.msra.mxu0 0.0
    %557 = vmatpush.msra.mxu0 0.0
    %558 = vmatpush.msra.mxu0 0.0
    %559 = vmatpush.msra.mxu0 %v543
    %560 = vmatpush.msra.mxu0 %v542
    %561 = vmatpush.msra.mxu0 %v541
    %562 = vmatpush.msra.mxu0 %v540
    %563 = vmatmul.f32.gmra.mxu0 %v545
    %v564 = vpop.f32.mrf.mxu0
    %v565 = vadd.f32 0.0, %v564
    %566 = vdwg.mxu0
    %vm567 = vcmask 130048
    %v569 = vsel %vm567, %v534, 0
    %571 = vmatpush.msra.mxu0 0.0
    %572 = vmatpush.msra.mxu0 0.0
    %573 = vmatpush.msra.mxu0 0.0
    %574 = vmatpush.msra.mxu0 0.0
    %575 = vmatpush.msra.mxu0 0.0
    %576 = vmatpush.msra.mxu0 0.0
    %577 = vmatpush.msra.mxu0 0.0
    %578 = vmatpush.msra.mxu0 0.0
    %579 = vmatpush.msra.mxu0 0.0
    %580 = vmatpush.msra.mxu0 0.0
    %581 = vmatpush.msra.mxu0 0.0
    %582 = vmatpush.msra.mxu0 0.0
    %583 = vmatpush.msra.mxu0 0.0
    %584 = vmatpush.msra.mxu0 0.0
    %585 = vmatpush.msra.mxu0 %v539
    %586 = vmatpush.msra.mxu0 %v538
    %587 = vmatmul.f32.gmra.mxu0 %v569
    %v588 = vpop.f32.mrf.mxu0
    %v589 = vadd.f32 %v565, %v588
    %590 = vdwg.mxu0
    %v591 = vld [vmem:[%s16] sm:$0x1]
    %593 = vset.pattern.permute.xlu0 0
    %594 = vperm.xlu0 %593, %v535
    %v595 = vpop.permute.xlu0 %594
    %v598 = vperm.slane %v591, 0
    %v600 = vmul.f32 %v595, %v598
    %v601 = vadd.f32 %v589, %v600
    %v602 = vld [vmem:[%s18] sm:$0x1]
    %v604 = vperm.slane %v602, 0
    %v606 = vadd.f32 %v601, %v604
    %vm607 = vcmp.ge.s32.totalorder %v249, 64
    %vm608 = vcmp.lt.s32.totalorder %v249, 96
    %vm609 = vmand %vm607, %vm608
    %v610 = vmul.f32 %v606, 0.5
    %v611 = vsel %vm609, %v606, %v610
    %v612 = vtanh.pop %v611
    %v613 = vmul.f32 %v612, 0.5
    %v614 = vadd.f32 %v613, 0.5
    %v615 = vsel %vm609, %v612, %v614
    %617 = vrot.lane.b32.xlu0 %v537, 32
    %v618 = vpop.permute.xlu0 %617
    %v620 = vmul.f32 %v615, %v618
    %622 = vrot.lane.b32.xlu0 %v615, 64
    %v623 = vpop.permute.xlu0 %622
    %v625 = vmul.f32 %v615, %v623
    %627 = vrot.lane.b32.xlu0 %v625, 32
    %v628 = vpop.permute.xlu0 %627
    %v630 = vadd.f32 %v620, %v628
    %v631 = vtanh.pop %v630
    %633 = vrot.lane.b32.xlu0 %v631, 64
    %v634 = vpop.permute.xlu0 %633
    %v636 = vmul.f32 %v615, %v634
    %638 = vrot.lane.b32.xlu0 %v636, 32
    %v639 = vpop.permute.xlu0 %638
    %641 = vst.msk [vmem:[#allocation10] sm:$0xf] %vm497, %v639
    %643 = vrot.lane.b32.xlu0 %v630, 96
    %v644 = vpop.permute.xlu0 %643
    %646 = vst.msk [vmem:[#allocation12] sm:$0xf] %vm497, %v644
    // Predicated region
    $region86: #{tpu_custom_call.1} parent=1 // pred_check
      _
    $region87: #{tpu_custom_call.1} parent=1 // pred_check_branch
      %648 = sbr.rel (0) target = $region89
    $region88: #{tpu_custom_call.1} parent=1 // pred_region
      %650 = vsyncadd [#allocation5], 0
      %s652 = sshll.u32 [#allocation9], 4
      %s653 = int_to_ptr.vmem [resolvable:$true] %s652
      %s654 = sshll.u32 %s19, 4
      %s655 = int_to_ptr.hbm [resolvable:$true] %s654
      %657 = dma.vmem_to_hbm [thread:$0]  %s653, 64, %s655, [#allocation5]
    $region89: #{tpu_custom_call.1} parent=1 // pred_fallthru
      _
    // Predicated region
    $region90: #{tpu_custom_call.1} parent=1 // pred_check
      _
    $region91: #{tpu_custom_call.1} parent=1 // pred_check_branch
      %659 = sbr.rel (0) target = $region93
    $region92: #{tpu_custom_call.1} parent=1 // pred_region
      _
    $region93: #{tpu_custom_call.1} parent=1 // pred_fallthru
      _
    // Predicated region
    $region94: #{tpu_custom_call.1} parent=1 // pred_check
      _
    $region95: #{tpu_custom_call.1} parent=1 // pred_check_branch
      %661 = sbr.rel (0) target = $region97
    $region96: #{tpu_custom_call.1} parent=1 // pred_region
      %663 = vsyncadd [#allocation11], 0
      %s665 = sshll.u32 [#allocation10], 4
      %s666 = int_to_ptr.vmem [resolvable:$true] %s665
      %s667 = sshll.u32 %s21, 4
      %s668 = int_to_ptr.hbm [resolvable:$true] %s667
      %670 = dma.vmem_to_hbm [thread:$0]  %s666, 64, %s668, [#allocation11]
    $region97: #{tpu_custom_call.1} parent=1 // pred_fallthru
      _
    // Predicated region
    $region98: #{tpu_custom_call.1} parent=1 // pred_check
      _
    $region99: #{tpu_custom_call.1} parent=1 // pred_check_branch
      %672 = sbr.rel (0) target = $region101
    $region100: #{tpu_custom_call.1} parent=1 // pred_region
      %674 = vsyncadd [#allocation11], 0
      %s676 = sshll.u32 [#allocation12], 4
      %s677 = int_to_ptr.vmem [resolvable:$true] %s676
      %s678 = sshll.u32 %s22, 4
      %s679 = int_to_ptr.hbm [resolvable:$true] %s678
      %681 = dma.vmem_to_hbm [thread:$0]  %s677, 64, %s679, [#allocation11]
    $region101: #{tpu_custom_call.1} parent=1 // pred_fallthru
      _
    // Predicated region
    $region102: #{tpu_custom_call.1} parent=1 // pred_check
      _
    $region103: #{tpu_custom_call.1} parent=1 // pred_check_branch
      %683 = sbr.rel (0) target = $region105
    $region104: #{tpu_custom_call.1} parent=1 // pred_region
      %685 = dma.done [#allocation5], 64
    $region105: #{tpu_custom_call.1} parent=1 // pred_fallthru
      _
    // Predicated region
    $region106: #{tpu_custom_call.1} parent=1 // pred_check
      _
    $region107: #{tpu_custom_call.1} parent=1 // pred_check_branch
      %687 = sbr.rel (0) target = $region109
    $region108: #{tpu_custom_call.1} parent=1 // pred_region
      _
    $region109: #{tpu_custom_call.1} parent=1 // pred_fallthru
      _
    // Predicated region
    $region110: #{tpu_custom_call.1} parent=1 // pred_check
      _
    $region111: #{tpu_custom_call.1} parent=1 // pred_check_branch
      %689 = sbr.rel (0) target = $region113
    $region112: #{tpu_custom_call.1} parent=1 // pred_region
      %691 = dma.done [#allocation11], 64
    $region113: #{tpu_custom_call.1} parent=1 // pred_fallthru
      _
    // Predicated region
    $region114: #{tpu_custom_call.1} parent=1 // pred_check
      _
    $region115: #{tpu_custom_call.1} parent=1 // pred_check_branch
      %693 = sbr.rel (0) target = $region117
    $region116: #{tpu_custom_call.1} parent=1 // pred_region
      %695 = dma.done [#allocation11], 64
    $region117: #{tpu_custom_call.1} parent=1 // pred_fallthru
      _
    %696 = vsyncpa [#allocation5], 1
    %697 = vsyncpa [#allocation11], 1
    %698 = vsyncpa [#allocation6], 1
    %699 = vsyncpa [#allocation8], 1

</llo_original>
